<compile_context>
chip_gen: v5e
topology: v5e:2x2
jax: 0.10.0
libtpu: 0.0.40
codegen_flags: <defaults>
</compile_context>

<pallas_src>
import jax
import jax.numpy as jnp
from jax.experimental import pallas as pl
from jax.experimental.pallas import tpu as pltpu

LANE = 128
SUBLANE = 8


def _round_up(x, m):
    return ((x + m - 1) // m) * m


def mlp_kernel(x_ref, w1_ref, b1_ref, w2_ref, b2_ref, o_ref):
    # Fused 2-layer MLP on one batch tile; everything stays in VMEM / vregs.
    hi = jax.lax.Precision.HIGHEST
    x = x_ref[...]                                                   # (TB, F)   f32
    h = jnp.dot(x, w1_ref[...], preferred_element_type=jnp.float32,
                precision=hi)                                        # (TB, Hp)  f32
    h = jnp.maximum(h + b1_ref[...], 0.0)                            # bias + ReLU
    y = jnp.dot(h, w2_ref[...], preferred_element_type=jnp.float32,
                precision=hi)                                        # (TB, n_out) f32
    o_ref[...] = (y + b2_ref[...]).astype(o_ref.dtype)


def prepare_params(params):
    """One-time packing: f32 weights with the hidden dim zero-padded to 128 lanes.

    Zero padding is numerically inert: relu(0) = 0 and the padded rows of W2
    contribute nothing. The output feature dim is NOT padded (that would blow
    up HBM write traffic)."""
    w1, b1, w2, b2 = params
    n_feature, hidden = w1.shape
    n_out = w2.shape[1]
    h_pad = _round_up(hidden, LANE)

    w1p = jnp.zeros((n_feature, h_pad), jnp.float32).at[:, :hidden].set(
        w1.astype(jnp.float32))
    b1p = jnp.zeros((1, h_pad), jnp.float32).at[:, :hidden].set(
        b1.reshape(1, -1).astype(jnp.float32))
    w2p = jnp.zeros((h_pad, n_out), jnp.float32).at[:hidden, :].set(
        w2.astype(jnp.float32))
    b2p = b2.reshape(1, -1).astype(jnp.float32)
    return w1p, b1p, w2p, b2p


def net7_forward(x, prepared, *, tile_b=2048):
    """Net_7 forward. x: (B, n_feature) f32 -> (B, n_output) f32."""
    w1p, b1p, w2p, b2p = prepared
    B, n_feature = x.shape
    h_pad = w1p.shape[1]
    n_out = w2p.shape[1]

    # Sublane-aligned batch tile, clamped for small batches.
    tb = max(SUBLANE, min(_round_up(tile_b, SUBLANE), _round_up(B, SUBLANE)))
    # v7x: keep >= 4 grid steps (>= 2 per TensorCore) so the "parallel" batch
    # axis can shard across both cores; no-op for small batches.
    while tb > 512 and pl.cdiv(B, tb) < 4:
        tb = _round_up(tb // 2, SUBLANE)

    grid = (pl.cdiv(B, tb),)  # ragged last tile handled by Pallas write masking

    return pl.pallas_call(
        mlp_kernel,
        out_shape=jax.ShapeDtypeStruct((B, n_out), jnp.float32),
        grid=grid,
        in_specs=[
            pl.BlockSpec((tb, n_feature), lambda i: (i, 0)),     # streamed batch tile
            pl.BlockSpec((n_feature, h_pad), lambda i: (0, 0)),  # VMEM-resident weights
            pl.BlockSpec((1, h_pad), lambda i: (0, 0)),
            pl.BlockSpec((h_pad, n_out), lambda i: (0, 0)),
            pl.BlockSpec((1, n_out), lambda i: (0, 0)),
        ],
        out_specs=pl.BlockSpec((tb, n_out), lambda i: (i, 0)),   # exact-shape output
        compiler_params=pltpu.CompilerParams(
            # Batch tiles are independent -> shard across TensorCores on v7x.
            dimension_semantics=("parallel",),
        ),
    )(x, w1p, b1p, w2p, b2p)


def init_params(key, n_feature, n_output, hidden=10):
    # PyTorch Linear default init: U(-1/sqrt(fan_in), 1/sqrt(fan_in)) for W and b.
    dims = [(n_feature, hidden), (hidden, n_output)]
    params = []
    for fan_in, fan_out in dims:
        kw, kb, key = jax.random.split(key, 3)
        bound = 1.0 / float(fan_in) ** 0.5
        w = jax.random.uniform(kw, (fan_in, fan_out), jnp.float32, -bound, bound)
        b = jax.random.uniform(kb, (fan_out,), jnp.float32, -bound, bound)
        params += [w, b]
    return tuple(params)


def net7_reference(x, params):
    # Pure-JAX f32 reference (matches PyTorch forward semantics).
    w1, b1, w2, b2 = params
    hi = jax.lax.Precision.HIGHEST
    h = jnp.maximum(jnp.dot(x, w1, precision=hi) + b1.reshape(1, -1), 0.0)
    return jnp.dot(h, w2, precision=hi) + b2.reshape(1, -1)


if __name__ == "__main__":
    key = jax.random.PRNGKey(0)
    kx, kp, kx2 = jax.random.split(key, 3)

    n_feature, n_output = 32, 4
    params = init_params(kp, n_feature, n_output)
    prepared = prepare_params(params)   # one-time weight packing (hoisted out of forward)

    # Small, tile-aligned batch.
    x = jax.random.normal(kx, (8, n_feature), jnp.float32)
    out = jax.block_until_ready(net7_forward(x, prepared))
    assert out.shape == (8, n_output)
    ref = net7_reference(x, params)
    assert jnp.allclose(out, ref, atol=5e-3, rtol=5e-3), "mismatch (aligned batch)"

    # Ragged batch: exercises the partial last block (50 rows, 32-row tiles).
    x2 = jax.random.normal(kx2, (50, n_feature), jnp.float32)
    out2 = jax.block_until_ready(net7_forward(x2, prepared, tile_b=32))
    assert out2.shape == (50, n_output)
    ref2 = net7_reference(x2, params)
    assert jnp.allclose(out2, ref2, atol=5e-3, rtol=5e-3), "mismatch (ragged batch)"

    print("KERNEL_OK")
</pallas_src>

<mosaic_0001>
module attributes {stable_mosaic.version = 11 : i64} {
  func.func @mlp_kernel(%arg0: i32, %arg1: memref<8x32xf32, #tpu.memory_space<vmem>>, %arg2: memref<32x128xf32, #tpu.memory_space<vmem>>, %arg3: memref<1x128xf32, #tpu.memory_space<vmem>>, %arg4: memref<128x4xf32, #tpu.memory_space<vmem>>, %arg5: memref<1x4xf32, #tpu.memory_space<vmem>>, %arg6: memref<8x4xf32, #tpu.memory_space<vmem>>) attributes {dimension_semantics = [#tpu.dimension_semantics<parallel>], iteration_bounds = array<i64: 1>, scalar_prefetch = 0 : i64, scratch_operands = 0 : i64, tpu.core_type = #tpu.core_type<tc>, window_params = [{transform_indices = @transform_0, window_bounds = array<i64: 8, 32>}, {pipeline_mode = #tpu.pipeline_mode<synchronous>, transform_indices = @transform_1, window_bounds = array<i64: 32, 128>}, {pipeline_mode = #tpu.pipeline_mode<synchronous>, transform_indices = @transform_2, window_bounds = array<i64: 1, 128>}, {pipeline_mode = #tpu.pipeline_mode<synchronous>, transform_indices = @transform_3, window_bounds = array<i64: 128, 4>}, {pipeline_mode = #tpu.pipeline_mode<synchronous>, transform_indices = @transform_4, window_bounds = array<i64: 1, 4>}, {transform_indices = @transform_5, window_bounds = array<i64: 8, 4>}]} {
    %c0 = arith.constant 0 : index
    %c0_0 = arith.constant 0 : index
    %0 = vector.load %arg1[%c0, %c0_0] : memref<8x32xf32, #tpu.memory_space<vmem>>, vector<8x32xf32>
    %c0_1 = arith.constant 0 : index
    %c0_2 = arith.constant 0 : index
    %1 = vector.load %arg2[%c0_1, %c0_2] : memref<32x128xf32, #tpu.memory_space<vmem>>, vector<32x128xf32>
    %cst = arith.constant dense<0.000000e+00> : vector<8x128xf32>
    %2 = tpu.matmul %0, %1, %cst {dimension_numbers = #tpu.dot_dimension_numbers<[1], [0], [0], [1], [0, 0, 1, 1], [], []>, precision = #tpu.contract_precision<fp32>} : vector<8x32xf32>, vector<32x128xf32>, vector<8x128xf32> -> vector<8x128xf32>
    %c0_3 = arith.constant 0 : index
    %c0_4 = arith.constant 0 : index
    %3 = vector.load %arg3[%c0_3, %c0_4] : memref<1x128xf32, #tpu.memory_space<vmem>>, vector<1x128xf32>
    %4 = vector.broadcast %3 : vector<1x128xf32> to vector<8x128xf32>
    %5 = arith.addf %2, %4 : vector<8x128xf32>
    %cst_5 = arith.constant 0.000000e+00 : f32
    %6 = vector.broadcast %cst_5 : f32 to vector<8x128xf32>
    %7 = arith.maximumf %5, %6 : vector<8x128xf32>
    %c0_6 = arith.constant 0 : index
    %c0_7 = arith.constant 0 : index
    %8 = vector.load %arg4[%c0_6, %c0_7] : memref<128x4xf32, #tpu.memory_space<vmem>>, vector<128x4xf32>
    %cst_8 = arith.constant dense<0.000000e+00> : vector<8x4xf32>
    %9 = tpu.matmul %7, %8, %cst_8 {dimension_numbers = #tpu.dot_dimension_numbers<[1], [0], [0], [1], [0, 0, 1, 1], [], []>, precision = #tpu.contract_precision<fp32>} : vector<8x128xf32>, vector<128x4xf32>, vector<8x4xf32> -> vector<8x4xf32>
    %c0_9 = arith.constant 0 : index
    %c0_10 = arith.constant 0 : index
    %10 = vector.load %arg5[%c0_9, %c0_10] : memref<1x4xf32, #tpu.memory_space<vmem>>, vector<1x4xf32>
    %11 = vector.broadcast %10 : vector<1x4xf32> to vector<8x4xf32>
    %12 = arith.addf %9, %11 : vector<8x4xf32>
    %c0_11 = arith.constant 0 : index
    %c0_12 = arith.constant 0 : index
    %13 = vector.load %arg6[%c0_11, %c0_12] : memref<8x4xf32, #tpu.memory_space<vmem>>, vector<8x4xf32>
    tpu.vector_store %arg6[%c0_11, %c0_12], %12 {strides = array<i32>} : memref<8x4xf32, #tpu.memory_space<vmem>>, vector<8x4xf32>,
    return
  }
  func.func @transform_0(%arg0: i32) -> (i32, i32) {
    %c0_i32 = arith.constant 0 : i32
    %c0_i32_0 = arith.constant 0 : i32
    return %arg0, %c0_i32 : i32, i32
  }
  func.func @transform_1(%arg0: i32) -> (i32, i32) {
    %c0_i32 = arith.constant 0 : i32
    %c0_i32_0 = arith.constant 0 : i32
    %c0_i32_1 = arith.constant 0 : i32
    return %c0_i32, %c0_i32_0 : i32, i32
  }
  func.func @transform_2(%arg0: i32) -> (i32, i32) {
    %c0_i32 = arith.constant 0 : i32
    %c0_i32_0 = arith.constant 0 : i32
    %c0_i32_1 = arith.constant 0 : i32
    return %c0_i32, %c0_i32_0 : i32, i32
  }
  func.func @transform_3(%arg0: i32) -> (i32, i32) {
    %c0_i32 = arith.constant 0 : i32
    %c0_i32_0 = arith.constant 0 : i32
    %c0_i32_1 = arith.constant 0 : i32
    return %c0_i32, %c0_i32_0 : i32, i32
  }
  func.func @transform_4(%arg0: i32) -> (i32, i32) {
    %c0_i32 = arith.constant 0 : i32
    %c0_i32_0 = arith.constant 0 : i32
    %c0_i32_1 = arith.constant 0 : i32
    return %c0_i32, %c0_i32_0 : i32, i32
  }
  func.func @transform_5(%arg0: i32) -> (i32, i32) {
    %c0_i32 = arith.constant 0 : i32
    %c0_i32_0 = arith.constant 0 : i32
    return %arg0, %c0_i32 : i32, i32
  }
}

</mosaic_0001>

<llo_original>
// kernel: tpu_custom_call.1
$region0: #{tpu_custom_call.1}
  #allocation0 [shape = 'u32[]', space=smem, size = 0x4, offset = 0x4, fixed_abs, tag = 'smem constant byte address 0x4 - core index']
  #allocation1 [shape = 'u32[72,128]{1,0:T(1,128)}', space=vmem, size = 0x9000, scoped, tag = 'internal scratch']
  %s0 = inlined_call_operand.vmem [shape: f32[8,32], index: 0, kind: input, shape index: {}]
  %s1 = inlined_call_operand.vmem [shape: f32[32,128], index: 1, kind: input, shape index: {}]
  %s2 = inlined_call_operand.vmem [shape: f32[1,128], index: 2, kind: input, shape index: {}]
  %s3 = inlined_call_operand.vmem [shape: f32[128,4], index: 3, kind: input, shape index: {}]
  %s4 = inlined_call_operand.vmem [shape: f32[1,4], index: 4, kind: input, shape index: {}]
  %s5 = inlined_call_operand.vmem [shape: f32[8,4], index: 5, kind: output, shape index: {}]
  %s6 = sld [smem:[#allocation0]]
  $region30: #{tpu_custom_call.1} parent=0
    _
  %s8 = ssub.s32 1, %s6
  %s9 = scalar_select 0, %s8, %s6
  // Predicated region
  $region2: #{tpu_custom_call.1} parent=0 // pred_check
    _
  $region3: #{tpu_custom_call.1} parent=0 // pred_check_branch
    %11 = sbr.rel (0) target = $region5
  $region4: #{tpu_custom_call.1} parent=0 // pred_region
    _
  $region5: #{tpu_custom_call.1} parent=0 // pred_fallthru
    _
  // Predicated region
  $region6: #{tpu_custom_call.1} parent=0 // pred_check
    _
  $region7: #{tpu_custom_call.1} parent=0 // pred_check_branch
    %13 = sbr.rel (0) target = $region9
  $region8: #{tpu_custom_call.1} parent=0 // pred_region
    _
  $region9: #{tpu_custom_call.1} parent=0 // pred_fallthru
    _
  // Predicated region
  $region10: #{tpu_custom_call.1} parent=0 // pred_check
    _
  $region11: #{tpu_custom_call.1} parent=0 // pred_check_branch
    %15 = sbr.rel (0) target = $region13
  $region12: #{tpu_custom_call.1} parent=0 // pred_region
    _
  $region13: #{tpu_custom_call.1} parent=0 // pred_fallthru
    _
  // Predicated region
  $region14: #{tpu_custom_call.1} parent=0 // pred_check
    _
  $region15: #{tpu_custom_call.1} parent=0 // pred_check_branch
    %17 = sbr.rel (0) target = $region17
  $region16: #{tpu_custom_call.1} parent=0 // pred_region
    _
  $region17: #{tpu_custom_call.1} parent=0 // pred_fallthru
    _
  // Predicated region
  $region18: #{tpu_custom_call.1} parent=0 // pred_check
    _
  $region19: #{tpu_custom_call.1} parent=0 // pred_check_branch
    %19 = sbr.rel (0) target = $region21
  $region20: #{tpu_custom_call.1} parent=0 // pred_region
    _
  $region21: #{tpu_custom_call.1} parent=0 // pred_fallthru
    _
  %v20 = vld [vmem:[%s0] sm:$0xff]
  %v21 = vld [vmem:[%s1] sm:$0xff]
  %v22 = vld [vmem:[%s1 + $0x8] sm:$0xff]
  %v23 = vld [vmem:[%s1 + $0x10] sm:$0xff]
  %v24 = vld [vmem:[%s1 + $0x18] sm:$0xff]
  %v25 = vld [vmem:[%s2] sm:$0x1]
  %v27 = vperm.slane %v25, 0
  %vm29 = vcmask 261120
  %v31 = vsel %vm29, %v20, 0
  %33 = vmatpush.msra.mxu0 0.0
  %34 = vmatpush.msra.mxu0 0.0
  %35 = vmatpush.msra.mxu0 0.0
  %36 = vmatpush.msra.mxu0 0.0
  %37 = vmatpush.msra.mxu0 0.0
  %38 = vmatpush.msra.mxu0 0.0
  %39 = vmatpush.msra.mxu0 0.0
  %40 = vmatpush.msra.mxu0 0.0
  %41 = vmatpush.msra.mxu0 0.0
  %42 = vmatpush.msra.mxu0 0.0
  %43 = vmatpush.msra.mxu0 0.0
  %44 = vmatpush.msra.mxu0 0.0
  %v45 = vand.u32 %v24, 4294901760
  %46 = vmatpush.msra.mxu0 %v45
  %v47 = vand.u32 %v23, 4294901760
  %48 = vmatpush.msra.mxu0 %v47
  %v49 = vand.u32 %v22, 4294901760
  %50 = vmatpush.msra.mxu0 %v49
  %v51 = vand.u32 %v21, 4294901760
  %52 = vmatpush.msra.mxu0 %v51
  %v53 = vand.u32 %v31, 4294901760
  %v54 = vsub.f32 %v31, %v53
  %v55 = vand.u32 %v54, 4294901760
  %v56 = vsub.f32 %v54, %v55
  %v57 = vand.u32 %v56, 4294901760
  %58 = vmatmul.f32.gmra.mxu0 %v57
  %v59 = vpop.f32.mrf.mxu0
  %v60 = vadd.f32 %v27, %v59
  %61 = vdwg.mxu0
  %62 = vmatpush.msra.mxu0 0.0
  %63 = vmatpush.msra.mxu0 0.0
  %64 = vmatpush.msra.mxu0 0.0
  %65 = vmatpush.msra.mxu0 0.0
  %66 = vmatpush.msra.mxu0 0.0
  %67 = vmatpush.msra.mxu0 0.0
  %68 = vmatpush.msra.mxu0 0.0
  %69 = vmatpush.msra.mxu0 0.0
  %70 = vmatpush.msra.mxu0 0.0
  %71 = vmatpush.msra.mxu0 0.0
  %72 = vmatpush.msra.mxu0 0.0
  %73 = vmatpush.msra.mxu0 0.0
  %v74 = vand.u32 %v24, 4294901760
  %v75 = vsub.f32 %v24, %v74
  %v76 = vand.u32 %v75, 4294901760
  %v77 = vsub.f32 %v75, %v76
  %v78 = vand.u32 %v77, 4294901760
  %79 = vmatpush.msra.mxu0 %v78
  %v80 = vand.u32 %v23, 4294901760
  %v81 = vsub.f32 %v23, %v80
  %v82 = vand.u32 %v81, 4294901760
  %v83 = vsub.f32 %v81, %v82
  %v84 = vand.u32 %v83, 4294901760
  %85 = vmatpush.msra.mxu0 %v84
  %v86 = vand.u32 %v22, 4294901760
  %v87 = vsub.f32 %v22, %v86
  %v88 = vand.u32 %v87, 4294901760
  %v89 = vsub.f32 %v87, %v88
  %v90 = vand.u32 %v89, 4294901760
  %91 = vmatpush.msra.mxu0 %v90
  %v92 = vand.u32 %v21, 4294901760
  %v93 = vsub.f32 %v21, %v92
  %v94 = vand.u32 %v93, 4294901760
  %v95 = vsub.f32 %v93, %v94
  %v96 = vand.u32 %v95, 4294901760
  %97 = vmatpush.msra.mxu0 %v96
  %v98 = vand.u32 %v31, 4294901760
  %99 = vmatmul.f32.gmra.mxu0 %v98
  %v100 = vpop.f32.mrf.mxu0
  %v101 = vadd.f32 %v60, %v100
  %102 = vdwg.mxu0
  %103 = vmatpush.msra.mxu0 0.0
  %104 = vmatpush.msra.mxu0 0.0
  %105 = vmatpush.msra.mxu0 0.0
  %106 = vmatpush.msra.mxu0 0.0
  %107 = vmatpush.msra.mxu0 0.0
  %108 = vmatpush.msra.mxu0 0.0
  %109 = vmatpush.msra.mxu0 0.0
  %110 = vmatpush.msra.mxu0 0.0
  %111 = vmatpush.msra.mxu0 0.0
  %112 = vmatpush.msra.mxu0 0.0
  %113 = vmatpush.msra.mxu0 0.0
  %114 = vmatpush.msra.mxu0 0.0
  %v115 = vand.u32 %v24, 4294901760
  %v116 = vsub.f32 %v24, %v115
  %117 = vmatpush.msra.mxu0 %v116
  %v118 = vand.u32 %v23, 4294901760
  %v119 = vsub.f32 %v23, %v118
  %120 = vmatpush.msra.mxu0 %v119
  %v121 = vand.u32 %v22, 4294901760
  %v122 = vsub.f32 %v22, %v121
  %123 = vmatpush.msra.mxu0 %v122
  %v124 = vand.u32 %v21, 4294901760
  %v125 = vsub.f32 %v21, %v124
  %126 = vmatpush.msra.mxu0 %v125
  %v127 = vand.u32 %v31, 4294901760
  %v128 = vsub.f32 %v31, %v127
  %129 = vmatmul.f32.gmra.mxu0 %v128
  %v130 = vpop.f32.mrf.mxu0
  %v131 = vadd.f32 %v101, %v130
  %132 = vdwg.mxu0
  %133 = vmatpush.msra.mxu0 0.0
  %134 = vmatpush.msra.mxu0 0.0
  %135 = vmatpush.msra.mxu0 0.0
  %136 = vmatpush.msra.mxu0 0.0
  %137 = vmatpush.msra.mxu0 0.0
  %138 = vmatpush.msra.mxu0 0.0
  %139 = vmatpush.msra.mxu0 0.0
  %140 = vmatpush.msra.mxu0 0.0
  %141 = vmatpush.msra.mxu0 0.0
  %142 = vmatpush.msra.mxu0 0.0
  %143 = vmatpush.msra.mxu0 0.0
  %144 = vmatpush.msra.mxu0 0.0
  %v145 = vand.u32 %v24, 4294901760
  %146 = vmatpush.msra.mxu0 %v145
  %v147 = vand.u32 %v23, 4294901760
  %148 = vmatpush.msra.mxu0 %v147
  %v149 = vand.u32 %v22, 4294901760
  %150 = vmatpush.msra.mxu0 %v149
  %v151 = vand.u32 %v21, 4294901760
  %152 = vmatpush.msra.mxu0 %v151
  %v153 = vand.u32 %v31, 4294901760
  %v154 = vsub.f32 %v31, %v153
  %v155 = vand.u32 %v154, 4294901760
  %156 = vmatmul.f32.gmra.mxu0 %v155
  %v157 = vpop.f32.mrf.mxu0
  %v158 = vadd.f32 %v131, %v157
  %159 = vdwg.mxu0
  %160 = vmatpush.msra.mxu0 0.0
  %161 = vmatpush.msra.mxu0 0.0
  %162 = vmatpush.msra.mxu0 0.0
  %163 = vmatpush.msra.mxu0 0.0
  %164 = vmatpush.msra.mxu0 0.0
  %165 = vmatpush.msra.mxu0 0.0
  %166 = vmatpush.msra.mxu0 0.0
  %167 = vmatpush.msra.mxu0 0.0
  %168 = vmatpush.msra.mxu0 0.0
  %169 = vmatpush.msra.mxu0 0.0
  %170 = vmatpush.msra.mxu0 0.0
  %171 = vmatpush.msra.mxu0 0.0
  %v172 = vand.u32 %v24, 4294901760
  %v173 = vsub.f32 %v24, %v172
  %v174 = vand.u32 %v173, 4294901760
  %175 = vmatpush.msra.mxu0 %v174
  %v176 = vand.u32 %v23, 4294901760
  %v177 = vsub.f32 %v23, %v176
  %v178 = vand.u32 %v177, 4294901760
  %179 = vmatpush.msra.mxu0 %v178
  %v180 = vand.u32 %v22, 4294901760
  %v181 = vsub.f32 %v22, %v180
  %v182 = vand.u32 %v181, 4294901760
  %183 = vmatpush.msra.mxu0 %v182
  %v184 = vand.u32 %v21, 4294901760
  %v185 = vsub.f32 %v21, %v184
  %v186 = vand.u32 %v185, 4294901760
  %187 = vmatpush.msra.mxu0 %v186
  %v188 = vand.u32 %v31, 4294901760
  %189 = vmatmul.f32.gmra.mxu0 %v188
  %v190 = vpop.f32.mrf.mxu0
  %v191 = vadd.f32 %v158, %v190
  %192 = vdwg.mxu0
  %193 = vmatpush.msra.mxu0 0.0
  %194 = vmatpush.msra.mxu0 0.0
  %195 = vmatpush.msra.mxu0 0.0
  %196 = vmatpush.msra.mxu0 0.0
  %197 = vmatpush.msra.mxu0 0.0
  %198 = vmatpush.msra.mxu0 0.0
  %199 = vmatpush.msra.mxu0 0.0
  %200 = vmatpush.msra.mxu0 0.0
  %201 = vmatpush.msra.mxu0 0.0
  %202 = vmatpush.msra.mxu0 0.0
  %203 = vmatpush.msra.mxu0 0.0
  %204 = vmatpush.msra.mxu0 0.0
  %v205 = vand.u32 %v24, 4294901760
  %206 = vmatpush.msra.mxu0 %v205
  %v207 = vand.u32 %v23, 4294901760
  %208 = vmatpush.msra.mxu0 %v207
  %v209 = vand.u32 %v22, 4294901760
  %210 = vmatpush.msra.mxu0 %v209
  %v211 = vand.u32 %v21, 4294901760
  %212 = vmatpush.msra.mxu0 %v211
  %v213 = vand.u32 %v31, 4294901760
  %214 = vmatmul.f32.gmra.mxu0 %v213
  %v215 = vpop.f32.mrf.mxu0
  %v216 = vadd.f32 %v191, %v215
  %217 = vdwg.mxu0
  %v218 = vmax.f32 %v216, 0.0
  %v219 = vld [vmem:[%s3] sm:$0xff]
  %v220 = vld [vmem:[%s3 + $0x8] sm:$0xff]
  %v221 = vld [vmem:[%s3 + $0x10] sm:$0xff]
  %v222 = vld [vmem:[%s3 + $0x18] sm:$0xff]
  %v223 = vld [vmem:[%s3 + $0x20] sm:$0xff]
  %v224 = vld [vmem:[%s3 + $0x28] sm:$0xff]
  %v225 = vld [vmem:[%s3 + $0x30] sm:$0xff]
  %v226 = vld [vmem:[%s3 + $0x38] sm:$0xff]
  %v227 = vld [vmem:[%s3 + $0x40] sm:$0xff]
  %v228 = vld [vmem:[%s3 + $0x48] sm:$0xff]
  %v229 = vld [vmem:[%s3 + $0x50] sm:$0xff]
  %v230 = vld [vmem:[%s3 + $0x58] sm:$0xff]
  %v231 = vld [vmem:[%s3 + $0x60] sm:$0xff]
  %v232 = vld [vmem:[%s3 + $0x68] sm:$0xff]
  %v233 = vld [vmem:[%s3 + $0x70] sm:$0xff]
  %v234 = vld [vmem:[%s3 + $0x78] sm:$0xff]
  %v235 = vld [vmem:[%s4] sm:$0x1]
  %v237 = vperm.slane %v235, 0
  %v239 = vand.u32 %v234, 4294901760
  %240 = vmatpush.msra.mxu0 %v239
  %v241 = vand.u32 %v233, 4294901760
  %242 = vmatpush.msra.mxu0 %v241
  %v243 = vand.u32 %v232, 4294901760
  %244 = vmatpush.msra.mxu0 %v243
  %v245 = vand.u32 %v231, 4294901760
  %246 = vmatpush.msra.mxu0 %v245
  %v247 = vand.u32 %v230, 4294901760
  %248 = vmatpush.msra.mxu0 %v247
  %v249 = vand.u32 %v229, 4294901760
  %250 = vmatpush.msra.mxu0 %v249
  %v251 = vand.u32 %v228, 4294901760
  %252 = vmatpush.msra.mxu0 %v251
  %v253 = vand.u32 %v227, 4294901760
  %254 = vmatpush.msra.mxu0 %v253
  %v255 = vand.u32 %v226, 4294901760
  %256 = vmatpush.msra.mxu0 %v255
  %v257 = vand.u32 %v225, 4294901760
  %258 = vmatpush.msra.mxu0 %v257
  %v259 = vand.u32 %v224, 4294901760
  %260 = vmatpush.msra.mxu0 %v259
  %v261 = vand.u32 %v223, 4294901760
  %262 = vmatpush.msra.mxu0 %v261
  %v263 = vand.u32 %v222, 4294901760
  %264 = vmatpush.msra.mxu0 %v263
  %v265 = vand.u32 %v221, 4294901760
  %266 = vmatpush.msra.mxu0 %v265
  %v267 = vand.u32 %v220, 4294901760
  %268 = vmatpush.msra.mxu0 %v267
  %v269 = vand.u32 %v219, 4294901760
  %270 = vmatpush.msra.mxu0 %v269
  %v271 = vand.u32 %v218, 4294901760
  %v272 = vsub.f32 %v218, %v271
  %v273 = vand.u32 %v272, 4294901760
  %v274 = vsub.f32 %v272, %v273
  %v275 = vand.u32 %v274, 4294901760
  %276 = vmatmul.f32.gmra.mxu0 %v275
  %v277 = vpop.f32.mrf.mxu0
  %v278 = vadd.f32 %v237, %v277
  %279 = vdwg.mxu0
  %v280 = vand.u32 %v234, 4294901760
  %v281 = vsub.f32 %v234, %v280
  %v282 = vand.u32 %v281, 4294901760
  %v283 = vsub.f32 %v281, %v282
  %v284 = vand.u32 %v283, 4294901760
  %285 = vmatpush.msra.mxu0 %v284
  %v286 = vand.u32 %v233, 4294901760
  %v287 = vsub.f32 %v233, %v286
  %v288 = vand.u32 %v287, 4294901760
  %v289 = vsub.f32 %v287, %v288
  %v290 = vand.u32 %v289, 4294901760
  %291 = vmatpush.msra.mxu0 %v290
  %v292 = vand.u32 %v232, 4294901760
  %v293 = vsub.f32 %v232, %v292
  %v294 = vand.u32 %v293, 4294901760
  %v295 = vsub.f32 %v293, %v294
  %v296 = vand.u32 %v295, 4294901760
  %297 = vmatpush.msra.mxu0 %v296
  %v298 = vand.u32 %v231, 4294901760
  %v299 = vsub.f32 %v231, %v298
  %v300 = vand.u32 %v299, 4294901760
  %v301 = vsub.f32 %v299, %v300
  %v302 = vand.u32 %v301, 4294901760
  %303 = vmatpush.msra.mxu0 %v302
  %v304 = vand.u32 %v230, 4294901760
  %v305 = vsub.f32 %v230, %v304
  %v306 = vand.u32 %v305, 4294901760
  %v307 = vsub.f32 %v305, %v306
  %v308 = vand.u32 %v307, 4294901760
  %309 = vmatpush.msra.mxu0 %v308
  %v310 = vand.u32 %v229, 4294901760
  %v311 = vsub.f32 %v229, %v310
  %v312 = vand.u32 %v311, 4294901760
  %v313 = vsub.f32 %v311, %v312
  %v314 = vand.u32 %v313, 4294901760
  %315 = vmatpush.msra.mxu0 %v314
  %v316 = vand.u32 %v228, 4294901760
  %v317 = vsub.f32 %v228, %v316
  %v318 = vand.u32 %v317, 4294901760
  %v319 = vsub.f32 %v317, %v318
  %v320 = vand.u32 %v319, 4294901760
  %321 = vmatpush.msra.mxu0 %v320
  %v322 = vand.u32 %v227, 4294901760
  %v323 = vsub.f32 %v227, %v322
  %v324 = vand.u32 %v323, 4294901760
  %v325 = vsub.f32 %v323, %v324
  %v326 = vand.u32 %v325, 4294901760
  %327 = vmatpush.msra.mxu0 %v326
  %v328 = vand.u32 %v226, 4294901760
  %v329 = vsub.f32 %v226, %v328
  %v330 = vand.u32 %v329, 4294901760
  %v331 = vsub.f32 %v329, %v330
  %v332 = vand.u32 %v331, 4294901760
  %333 = vmatpush.msra.mxu0 %v332
  %v334 = vand.u32 %v225, 4294901760
  %v335 = vsub.f32 %v225, %v334
  %v336 = vand.u32 %v335, 4294901760
  %v337 = vsub.f32 %v335, %v336
  %v338 = vand.u32 %v337, 4294901760
  %339 = vmatpush.msra.mxu0 %v338
  %v340 = vand.u32 %v224, 4294901760
  %v341 = vsub.f32 %v224, %v340
  %v342 = vand.u32 %v341, 4294901760
  %v343 = vsub.f32 %v341, %v342
  %v344 = vand.u32 %v343, 4294901760
  %345 = vmatpush.msra.mxu0 %v344
  %v346 = vand.u32 %v223, 4294901760
  %v347 = vsub.f32 %v223, %v346
  %v348 = vand.u32 %v347, 4294901760
  %v349 = vsub.f32 %v347, %v348
  %v350 = vand.u32 %v349, 4294901760
  %351 = vmatpush.msra.mxu0 %v350
  %v352 = vand.u32 %v222, 4294901760
  %v353 = vsub.f32 %v222, %v352
  %v354 = vand.u32 %v353, 4294901760
  %v355 = vsub.f32 %v353, %v354
  %v356 = vand.u32 %v355, 4294901760
  %357 = vmatpush.msra.mxu0 %v356
  %v358 = vand.u32 %v221, 4294901760
  %v359 = vsub.f32 %v221, %v358
  %v360 = vand.u32 %v359, 4294901760
  %v361 = vsub.f32 %v359, %v360
  %v362 = vand.u32 %v361, 4294901760
  %363 = vmatpush.msra.mxu0 %v362
  %v364 = vand.u32 %v220, 4294901760
  %v365 = vsub.f32 %v220, %v364
  %v366 = vand.u32 %v365, 4294901760
  %v367 = vsub.f32 %v365, %v366
  %v368 = vand.u32 %v367, 4294901760
  %369 = vmatpush.msra.mxu0 %v368
  %v370 = vand.u32 %v219, 4294901760
  %v371 = vsub.f32 %v219, %v370
  %v372 = vand.u32 %v371, 4294901760
  %v373 = vsub.f32 %v371, %v372
  %v374 = vand.u32 %v373, 4294901760
  %375 = vmatpush.msra.mxu0 %v374
  %v376 = vand.u32 %v218, 4294901760
  %377 = vmatmul.f32.gmra.mxu0 %v376
  %v378 = vpop.f32.mrf.mxu0
  %v379 = vadd.f32 %v278, %v378
  %380 = vdwg.mxu0
  %v381 = vand.u32 %v234, 4294901760
  %v382 = vsub.f32 %v234, %v381
  %383 = vmatpush.msra.mxu0 %v382
  %v384 = vand.u32 %v233, 4294901760
  %v385 = vsub.f32 %v233, %v384
  %386 = vmatpush.msra.mxu0 %v385
  %v387 = vand.u32 %v232, 4294901760
  %v388 = vsub.f32 %v232, %v387
  %389 = vmatpush.msra.mxu0 %v388
  %v390 = vand.u32 %v231, 4294901760
  %v391 = vsub.f32 %v231, %v390
  %392 = vmatpush.msra.mxu0 %v391
  %v393 = vand.u32 %v230, 4294901760
  %v394 = vsub.f32 %v230, %v393
  %395 = vmatpush.msra.mxu0 %v394
  %v396 = vand.u32 %v229, 4294901760
  %v397 = vsub.f32 %v229, %v396
  %398 = vmatpush.msra.mxu0 %v397
  %v399 = vand.u32 %v228, 4294901760
  %v400 = vsub.f32 %v228, %v399
  %401 = vmatpush.msra.mxu0 %v400
  %v402 = vand.u32 %v227, 4294901760
  %v403 = vsub.f32 %v227, %v402
  %404 = vmatpush.msra.mxu0 %v403
  %v405 = vand.u32 %v226, 4294901760
  %v406 = vsub.f32 %v226, %v405
  %407 = vmatpush.msra.mxu0 %v406
  %v408 = vand.u32 %v225, 4294901760
  %v409 = vsub.f32 %v225, %v408
  %410 = vmatpush.msra.mxu0 %v409
  %v411 = vand.u32 %v224, 4294901760
  %v412 = vsub.f32 %v224, %v411
  %413 = vmatpush.msra.mxu0 %v412
  %v414 = vand.u32 %v223, 4294901760
  %v415 = vsub.f32 %v223, %v414
  %416 = vmatpush.msra.mxu0 %v415
  %v417 = vand.u32 %v222, 4294901760
  %v418 = vsub.f32 %v222, %v417
  %419 = vmatpush.msra.mxu0 %v418
  %v420 = vand.u32 %v221, 4294901760
  %v421 = vsub.f32 %v221, %v420
  %422 = vmatpush.msra.mxu0 %v421
  %v423 = vand.u32 %v220, 4294901760
  %v424 = vsub.f32 %v220, %v423
  %425 = vmatpush.msra.mxu0 %v424
  %v426 = vand.u32 %v219, 4294901760
  %v427 = vsub.f32 %v219, %v426
  %428 = vmatpush.msra.mxu0 %v427
  %v429 = vand.u32 %v218, 4294901760
  %v430 = vsub.f32 %v218, %v429
  %431 = vmatmul.f32.gmra.mxu0 %v430
  %v432 = vpop.f32.mrf.mxu0
  %v433 = vadd.f32 %v379, %v432
  %434 = vdwg.mxu0
  %v435 = vand.u32 %v234, 4294901760
  %436 = vmatpush.msra.mxu0 %v435
  %v437 = vand.u32 %v233, 4294901760
  %438 = vmatpush.msra.mxu0 %v437
  %v439 = vand.u32 %v232, 4294901760
  %440 = vmatpush.msra.mxu0 %v439
  %v441 = vand.u32 %v231, 4294901760
  %442 = vmatpush.msra.mxu0 %v441
  %v443 = vand.u32 %v230, 4294901760
  %444 = vmatpush.msra.mxu0 %v443
  %v445 = vand.u32 %v229, 4294901760
  %446 = vmatpush.msra.mxu0 %v445
  %v447 = vand.u32 %v228, 4294901760
  %448 = vmatpush.msra.mxu0 %v447
  %v449 = vand.u32 %v227, 4294901760
  %450 = vmatpush.msra.mxu0 %v449
  %v451 = vand.u32 %v226, 4294901760
  %452 = vmatpush.msra.mxu0 %v451
  %v453 = vand.u32 %v225, 4294901760
  %454 = vmatpush.msra.mxu0 %v453
  %v455 = vand.u32 %v224, 4294901760
  %456 = vmatpush.msra.mxu0 %v455
  %v457 = vand.u32 %v223, 4294901760
  %458 = vmatpush.msra.mxu0 %v457
  %v459 = vand.u32 %v222, 4294901760
  %460 = vmatpush.msra.mxu0 %v459
  %v461 = vand.u32 %v221, 4294901760
  %462 = vmatpush.msra.mxu0 %v461
  %v463 = vand.u32 %v220, 4294901760
  %464 = vmatpush.msra.mxu0 %v463
  %v465 = vand.u32 %v219, 4294901760
  %466 = vmatpush.msra.mxu0 %v465
  %v467 = vand.u32 %v218, 4294901760
  %v468 = vsub.f32 %v218, %v467
  %v469 = vand.u32 %v468, 4294901760
  %470 = vmatmul.f32.gmra.mxu0 %v469
  %v471 = vpop.f32.mrf.mxu0
  %v472 = vadd.f32 %v433, %v471
  %473 = vdwg.mxu0
  %v474 = vand.u32 %v234, 4294901760
  %v475 = vsub.f32 %v234, %v474
  %v476 = vand.u32 %v475, 4294901760
  %477 = vmatpush.msra.mxu0 %v476
  %v478 = vand.u32 %v233, 4294901760
  %v479 = vsub.f32 %v233, %v478
  %v480 = vand.u32 %v479, 4294901760
  %481 = vmatpush.msra.mxu0 %v480
  %v482 = vand.u32 %v232, 4294901760
  %v483 = vsub.f32 %v232, %v482
  %v484 = vand.u32 %v483, 4294901760
  %485 = vmatpush.msra.mxu0 %v484
  %v486 = vand.u32 %v231, 4294901760
  %v487 = vsub.f32 %v231, %v486
  %v488 = vand.u32 %v487, 4294901760
  %489 = vmatpush.msra.mxu0 %v488
  %v490 = vand.u32 %v230, 4294901760
  %v491 = vsub.f32 %v230, %v490
  %v492 = vand.u32 %v491, 4294901760
  %493 = vmatpush.msra.mxu0 %v492
  %v494 = vand.u32 %v229, 4294901760
  %v495 = vsub.f32 %v229, %v494
  %v496 = vand.u32 %v495, 4294901760
  %497 = vmatpush.msra.mxu0 %v496
  %v498 = vand.u32 %v228, 4294901760
  %v499 = vsub.f32 %v228, %v498
  %v500 = vand.u32 %v499, 4294901760
  %501 = vmatpush.msra.mxu0 %v500
  %v502 = vand.u32 %v227, 4294901760
  %v503 = vsub.f32 %v227, %v502
  %v504 = vand.u32 %v503, 4294901760
  %505 = vmatpush.msra.mxu0 %v504
  %v506 = vand.u32 %v226, 4294901760
  %v507 = vsub.f32 %v226, %v506
  %v508 = vand.u32 %v507, 4294901760
  %509 = vmatpush.msra.mxu0 %v508
  %v510 = vand.u32 %v225, 4294901760
  %v511 = vsub.f32 %v225, %v510
  %v512 = vand.u32 %v511, 4294901760
  %513 = vmatpush.msra.mxu0 %v512
  %v514 = vand.u32 %v224, 4294901760
  %v515 = vsub.f32 %v224, %v514
  %v516 = vand.u32 %v515, 4294901760
  %517 = vmatpush.msra.mxu0 %v516
  %v518 = vand.u32 %v223, 4294901760
  %v519 = vsub.f32 %v223, %v518
  %v520 = vand.u32 %v519, 4294901760
  %521 = vmatpush.msra.mxu0 %v520
  %v522 = vand.u32 %v222, 4294901760
  %v523 = vsub.f32 %v222, %v522
  %v524 = vand.u32 %v523, 4294901760
  %525 = vmatpush.msra.mxu0 %v524
  %v526 = vand.u32 %v221, 4294901760
  %v527 = vsub.f32 %v221, %v526
  %v528 = vand.u32 %v527, 4294901760
  %529 = vmatpush.msra.mxu0 %v528
  %v530 = vand.u32 %v220, 4294901760
  %v531 = vsub.f32 %v220, %v530
  %v532 = vand.u32 %v531, 4294901760
  %533 = vmatpush.msra.mxu0 %v532
  %v534 = vand.u32 %v219, 4294901760
  %v535 = vsub.f32 %v219, %v534
  %v536 = vand.u32 %v535, 4294901760
  %537 = vmatpush.msra.mxu0 %v536
  %v538 = vand.u32 %v218, 4294901760
  %539 = vmatmul.f32.gmra.mxu0 %v538
  %v540 = vpop.f32.mrf.mxu0
  %v541 = vadd.f32 %v472, %v540
  %542 = vdwg.mxu0
  %v543 = vand.u32 %v234, 4294901760
  %544 = vmatpush.msra.mxu0 %v543
  %v545 = vand.u32 %v233, 4294901760
  %546 = vmatpush.msra.mxu0 %v545
  %v547 = vand.u32 %v232, 4294901760
  %548 = vmatpush.msra.mxu0 %v547
  %v549 = vand.u32 %v231, 4294901760
  %550 = vmatpush.msra.mxu0 %v549
  %v551 = vand.u32 %v230, 4294901760
  %552 = vmatpush.msra.mxu0 %v551
  %v553 = vand.u32 %v229, 4294901760
  %554 = vmatpush.msra.mxu0 %v553
  %v555 = vand.u32 %v228, 4294901760
  %556 = vmatpush.msra.mxu0 %v555
  %v557 = vand.u32 %v227, 4294901760
  %558 = vmatpush.msra.mxu0 %v557
  %v559 = vand.u32 %v226, 4294901760
  %560 = vmatpush.msra.mxu0 %v559
  %v561 = vand.u32 %v225, 4294901760
  %562 = vmatpush.msra.mxu0 %v561
  %v563 = vand.u32 %v224, 4294901760
  %564 = vmatpush.msra.mxu0 %v563
  %v565 = vand.u32 %v223, 4294901760
  %566 = vmatpush.msra.mxu0 %v565
  %v567 = vand.u32 %v222, 4294901760
  %568 = vmatpush.msra.mxu0 %v567
  %v569 = vand.u32 %v221, 4294901760
  %570 = vmatpush.msra.mxu0 %v569
  %v571 = vand.u32 %v220, 4294901760
  %572 = vmatpush.msra.mxu0 %v571
  %v573 = vand.u32 %v219, 4294901760
  %574 = vmatpush.msra.mxu0 %v573
  %v575 = vand.u32 %v218, 4294901760
  %576 = vmatmul.f32.gmra.mxu0 %v575
  %v577 = vpop.f32.mrf.mxu0
  %v578 = vadd.f32 %v541, %v577
  %579 = vdwg.mxu0
  %vm580 = vcmask 31744
  %581 = vst.msk [vmem:[%s5] sm:$0xff] %vm580, %v578
  // Predicated region
  $region22: #{tpu_custom_call.1} parent=0 // pred_check
    _
  $region23: #{tpu_custom_call.1} parent=0 // pred_check_branch
    %583 = sbr.rel (0) target = $region25
  $region24: #{tpu_custom_call.1} parent=0 // pred_region
    _
  $region25: #{tpu_custom_call.1} parent=0 // pred_fallthru
    _
  // Predicated region
  $region26: #{tpu_custom_call.1} parent=0 // pred_check
    _
  $region27: #{tpu_custom_call.1} parent=0 // pred_check_branch
    %585 = sbr.rel (0) target = $region29
  $region28: #{tpu_custom_call.1} parent=0 // pred_region
    _
  $region29: #{tpu_custom_call.1} parent=0 // pred_fallthru
    _

</llo_original>
